<compile_context>
chip_gen: v7x
topology: tpu7x:2x2x1
jax: 0.10.0
libtpu: 0.0.40
codegen_flags: <defaults>
</compile_context>

<pallas_src>
import jax
import jax.numpy as jnp
from jax.experimental import pallas as pl
from jax.experimental.pallas import tpu as pltpu

LANE = 128
SUBLANE = 8


def iris_mlp_kernel(x_ref, w1_ref, w23_ref, b_ref, o_ref):
    # x_ref:   [TB, Fp]   bf16  (batch tile; Fp = input_size padded to 8)
    # w1_ref:  [Fp, D]    bf16  (fc1 weights, VMEM-resident)
    # w23_ref: [2, D, D]  bf16  (fc2/fc3 weights, VMEM-resident)
    # b_ref:   [3, D]     f32   (b1/b2/b3, VMEM-resident)
    # o_ref:   [TB, D]    bf16  (lane-dense; first num_classes cols valid)
    x = x_ref[...]                                   # bf16 [TB, Fp]
    b = b_ref[...]                                   # f32  [3, D]
    b1, b2, b3 = b[0:1, :], b[1:2, :], b[2:3, :]     # f32  [1, D] each

    h1 = jnp.dot(x, w1_ref[...], preferred_element_type=jnp.float32) + b1
    h1 = jnp.maximum(h1, 0.0).astype(jnp.bfloat16)   # ReLU in f32, MXU in bf16

    h2 = jnp.dot(h1, w23_ref[0], preferred_element_type=jnp.float32) + b2
    h2 = jnp.maximum(h2, 0.0).astype(jnp.bfloat16)

    out = jnp.dot(h2, w23_ref[1], preferred_element_type=jnp.float32) + b3
    o_ref[...] = out.astype(o_ref.dtype)             # full-width (unmasked) store


def pack_params(params):
    """Pack fc1/fc2/fc3 into three padded slabs.

    Weights are stored [in, out] (transposed vs. PyTorch's [out, in]).
    fc1 is padded only to [Fp=8, D]; fc2/fc3 are zero-padded to [D, D] with
    D = 128 * ceil(max_feature_dim / 128). Zero padding is exact: padded
    rows/cols contribute 0 to every dot and bias-add.
    """
    w1, w2, w3 = params["w1"], params["w2"], params["w3"]
    b1, b2, b3 = params["b1"], params["b2"], params["b3"]
    max_dim = max(w1.shape[1], w2.shape[0], w2.shape[1], w3.shape[1])
    D = LANE * pl.cdiv(max_dim, LANE)
    Fp = SUBLANE * pl.cdiv(w1.shape[0], SUBLANE)

    def pad_w(w, rows, cols):
        fi, fo = w.shape
        return jnp.zeros((rows, cols), jnp.bfloat16).at[:fi, :fo].set(
            w.astype(jnp.bfloat16))

    def pad_b(bv):
        bv = bv.reshape(-1)
        return jnp.zeros((D,), jnp.float32).at[: bv.shape[0]].set(
            bv.astype(jnp.float32))

    w1_slab = pad_w(w1, Fp, D)                                  # [Fp, D]   bf16
    w23_slab = jnp.stack([pad_w(w2, D, D), pad_w(w3, D, D)])    # [2, D, D] bf16
    b_slab = jnp.stack([pad_b(b1), pad_b(b2), pad_b(b3)])       # [3, D]    f32
    return w1_slab, w23_slab, b_slab


def iris_net_forward(x, w1_slab, w23_slab, b_slab, num_classes, *, tb=512):
    """x: [B, input_size] f32; slabs from pack_params(); returns [B, classes] bf16."""
    B, F = x.shape
    Fp, D = w1_slab.shape

    # Tile choice: whole batch in as few grid steps as possible (step overhead
    # ~0.35us vs ~0.2us of useful DMA at 256 rows); keep sublane alignment.
    tb = min(tb, SUBLANE * pl.cdiv(B, SUBLANE))
    tb = max(SUBLANE, (tb // SUBLANE) * SUBLANE)
    n_tiles = pl.cdiv(B, tb)
    Bp = n_tiles * tb

    # Only a tiny sublane/batch pad remains (Bp x 8 bf16 ~ 16 B/row).
    xp = jnp.pad(x.astype(jnp.bfloat16), ((0, Bp - B), (0, Fp - F)))

    flops = 2 * Bp * (Fp * D + 2 * D * D)
    bytes_accessed = (Bp * Fp + Fp * D + 2 * D * D + Bp * D) * 2 + 3 * D * 4

    out = pl.pallas_call(
        iris_mlp_kernel,
        out_shape=jax.ShapeDtypeStruct((Bp, D), jnp.bfloat16),
        grid=(n_tiles,),
        in_specs=[
            pl.BlockSpec((tb, Fp), lambda i: (i, 0)),        # x: tiled on batch
            pl.BlockSpec((Fp, D), lambda i: (0, 0)),         # fc1 weights: resident
            pl.BlockSpec((2, D, D), lambda i: (0, 0, 0)),    # fc2/fc3: resident
            pl.BlockSpec((3, D), lambda i: (0, 0)),          # biases: resident
        ],
        out_specs=pl.BlockSpec((tb, D), lambda i: (i, 0)),   # lane-dense bf16 out
        compiler_params=pltpu.CompilerParams(
            # Split across TCs only when there are >= 2 tiles of work.
            dimension_semantics=("parallel",) if n_tiles > 1 else ("arbitrary",),
        ),
        cost_estimate=pl.CostEstimate(
            flops=flops, transcendentals=0, bytes_accessed=bytes_accessed),
    )(xp, w1_slab, w23_slab, b_slab)

    return out[:B, :num_classes]


def init_params(key, input_size, hidden1, hidden2, num_classes):
    """Deterministic init mimicking nn.Linear's uniform(-1/sqrt(fan_in), ...).
    Weights stored as [in, out] (transposed relative to PyTorch's [out, in])."""
    ks = jax.random.split(key, 6)

    def linear(kw, kb, fan_in, fan_out):
        bound = 1.0 / jnp.sqrt(jnp.float32(fan_in))
        w = jax.random.uniform(kw, (fan_in, fan_out), jnp.float32, -bound, bound)
        b = jax.random.uniform(kb, (fan_out,), jnp.float32, -bound, bound)
        return w, b

    w1, b1 = linear(ks[0], ks[1], input_size, hidden1)
    w2, b2 = linear(ks[2], ks[3], hidden1, hidden2)
    w3, b3 = linear(ks[4], ks[5], hidden2, num_classes)
    return {"w1": w1, "b1": b1, "w2": w2, "b2": b2, "w3": w3, "b3": b3}


def reference_forward_matched(x, p):
    """JAX reference matching the kernel numerics (bf16 MXU inputs, f32 accum)."""
    bf = jnp.bfloat16
    h1 = jnp.dot(x.astype(bf), p["w1"].astype(bf),
                 preferred_element_type=jnp.float32) + p["b1"]
    h1 = jnp.maximum(h1, 0.0)
    h2 = jnp.dot(h1.astype(bf), p["w2"].astype(bf),
                 preferred_element_type=jnp.float32) + p["b2"]
    h2 = jnp.maximum(h2, 0.0)
    return jnp.dot(h2.astype(bf), p["w3"].astype(bf),
                   preferred_element_type=jnp.float32) + p["b3"]


def reference_forward_f32(x, p):
    h1 = jnp.maximum(x @ p["w1"] + p["b1"], 0.0)
    h2 = jnp.maximum(h1 @ p["w2"] + p["b2"], 0.0)
    return h2 @ p["w3"] + p["b3"]


if __name__ == "__main__":
    # Iris-like sizes: 4 input features, hidden 32/16, 3 classes.
    input_size, hidden1, hidden2, num_classes = 4, 32, 16, 3
    batch = 256   # small batch -> single full-size grid step (grid=(1,))

    key = jax.random.PRNGKey(0)
    k_x, k_p = jax.random.split(key)
    x = jax.random.normal(k_x, (batch, input_size), jnp.float32)
    params = init_params(k_p, input_size, hidden1, hidden2, num_classes)

    # Pack parameters once (3 small resident slabs instead of 7 tiny DMAs).
    w1_slab, w23_slab, b_slab = pack_params(params)

    out = jax.block_until_ready(
        iris_net_forward(x, w1_slab, w23_slab, b_slab, num_classes))

    assert out.shape == (batch, num_classes)
    out_f32 = out.astype(jnp.float32)

    ref_matched = reference_forward_matched(x, params)
    assert jnp.allclose(out_f32, ref_matched, atol=2e-2, rtol=2e-2), \
        "mismatch vs numerics-matched JAX reference (beyond bf16-output tolerance)"

    ref_f32 = reference_forward_f32(x, params)
    assert jnp.allclose(out_f32, ref_f32, atol=1e-1, rtol=1e-1), \
        "mismatch vs f32 JAX reference (beyond bf16 tolerance)"

    print("KERNEL_OK")
</pallas_src>

<mosaic_0001>
module attributes {stable_mosaic.version = 11 : i64} {
  func.func @iris_mlp_kernel(%arg0: i32, %arg1: memref<256x8xbf16, #tpu.memory_space<vmem>>, %arg2: memref<8x128xbf16, #tpu.memory_space<vmem>>, %arg3: memref<2x128x128xbf16, #tpu.memory_space<vmem>>, %arg4: memref<3x128xf32, #tpu.memory_space<vmem>>, %arg5: memref<256x128xbf16, #tpu.memory_space<vmem>>) attributes {dimension_semantics = [#tpu.dimension_semantics<arbitrary>], iteration_bounds = array<i64: 1>, scalar_prefetch = 0 : i64, scratch_operands = 0 : i64, tpu.core_type = #tpu.core_type<tc>, window_params = [{transform_indices = @transform_0, window_bounds = array<i64: 256, 8>}, {pipeline_mode = #tpu.pipeline_mode<synchronous>, transform_indices = @transform_1, window_bounds = array<i64: 8, 128>}, {pipeline_mode = #tpu.pipeline_mode<synchronous>, transform_indices = @transform_2, window_bounds = array<i64: 2, 128, 128>}, {pipeline_mode = #tpu.pipeline_mode<synchronous>, transform_indices = @transform_3, window_bounds = array<i64: 3, 128>}, {transform_indices = @transform_4, window_bounds = array<i64: 256, 128>}]} {
    %c0 = arith.constant 0 : index
    %c0_0 = arith.constant 0 : index
    %0 = vector.load %arg1[%c0, %c0_0] : memref<256x8xbf16, #tpu.memory_space<vmem>>, vector<256x8xbf16>
    %c0_1 = arith.constant 0 : index
    %c0_2 = arith.constant 0 : index
    %1 = vector.load %arg4[%c0_1, %c0_2] : memref<3x128xf32, #tpu.memory_space<vmem>>, vector<3x128xf32>
    %2 = vector.extract_strided_slice %1 {offsets = [0, 0], sizes = [1, 128], strides = [1, 1]} : vector<3x128xf32> to vector<1x128xf32>
    %3 = vector.extract_strided_slice %1 {offsets = [1, 0], sizes = [1, 128], strides = [1, 1]} : vector<3x128xf32> to vector<1x128xf32>
    %4 = vector.extract_strided_slice %1 {offsets = [2, 0], sizes = [1, 128], strides = [1, 1]} : vector<3x128xf32> to vector<1x128xf32>
    %c0_3 = arith.constant 0 : index
    %c0_4 = arith.constant 0 : index
    %5 = vector.load %arg2[%c0_3, %c0_4] : memref<8x128xbf16, #tpu.memory_space<vmem>>, vector<8x128xbf16>
    %cst = arith.constant dense<0.000000e+00> : vector<256x128xf32>
    %6 = tpu.matmul %0, %5, %cst {dimension_numbers = #tpu.dot_dimension_numbers<[1], [0], [0], [1], [0, 0, 1, 1], [], []>} : vector<256x8xbf16>, vector<8x128xbf16>, vector<256x128xf32> -> vector<256x128xf32>
    %7 = vector.broadcast %2 : vector<1x128xf32> to vector<256x128xf32>
    %8 = arith.addf %6, %7 : vector<256x128xf32>
    %cst_5 = arith.constant 0.000000e+00 : f32
    %9 = vector.broadcast %cst_5 : f32 to vector<256x128xf32>
    %10 = arith.maximumf %8, %9 : vector<256x128xf32>
    %11 = arith.truncf %10 : vector<256x128xf32> to vector<256x128xbf16>
    %c0_6 = arith.constant 0 : index
    %c0_7 = arith.constant 0 : index
    %c0_8 = arith.constant 0 : index
    %12 = vector.load %arg3[%c0_6, %c0_7, %c0_8] : memref<2x128x128xbf16, #tpu.memory_space<vmem>>, vector<1x128x128xbf16>
    %13 = vector.shape_cast %12 : vector<1x128x128xbf16> to vector<128x128xbf16>
    %cst_9 = arith.constant dense<0.000000e+00> : vector<256x128xf32>
    %14 = tpu.matmul %11, %13, %cst_9 {dimension_numbers = #tpu.dot_dimension_numbers<[1], [0], [0], [1], [0, 0, 1, 1], [], []>} : vector<256x128xbf16>, vector<128x128xbf16>, vector<256x128xf32> -> vector<256x128xf32>
    %15 = vector.broadcast %3 : vector<1x128xf32> to vector<256x128xf32>
    %16 = arith.addf %14, %15 : vector<256x128xf32>
    %cst_10 = arith.constant 0.000000e+00 : f32
    %17 = vector.broadcast %cst_10 : f32 to vector<256x128xf32>
    %18 = arith.maximumf %16, %17 : vector<256x128xf32>
    %19 = arith.truncf %18 : vector<256x128xf32> to vector<256x128xbf16>
    %c1 = arith.constant 1 : index
    %c0_11 = arith.constant 0 : index
    %c0_12 = arith.constant 0 : index
    %20 = vector.load %arg3[%c1, %c0_11, %c0_12] : memref<2x128x128xbf16, #tpu.memory_space<vmem>>, vector<1x128x128xbf16>
    %21 = vector.shape_cast %20 : vector<1x128x128xbf16> to vector<128x128xbf16>
    %cst_13 = arith.constant dense<0.000000e+00> : vector<256x128xf32>
    %22 = tpu.matmul %19, %21, %cst_13 {dimension_numbers = #tpu.dot_dimension_numbers<[1], [0], [0], [1], [0, 0, 1, 1], [], []>} : vector<256x128xbf16>, vector<128x128xbf16>, vector<256x128xf32> -> vector<256x128xf32>
    %23 = vector.broadcast %4 : vector<1x128xf32> to vector<256x128xf32>
    %24 = arith.addf %22, %23 : vector<256x128xf32>
    %25 = arith.truncf %24 : vector<256x128xf32> to vector<256x128xbf16>
    %c0_14 = arith.constant 0 : index
    %c0_15 = arith.constant 0 : index
    %26 = vector.load %arg5[%c0_14, %c0_15] : memref<256x128xbf16, #tpu.memory_space<vmem>>, vector<256x128xbf16>
    tpu.vector_store %arg5[%c0_14, %c0_15], %25 {strides = array<i32>} : memref<256x128xbf16, #tpu.memory_space<vmem>>, vector<256x128xbf16>,
    return
  }
  func.func @transform_0(%arg0: i32) -> (i32, i32) {
    %c0_i32 = arith.constant 0 : i32
    %c0_i32_0 = arith.constant 0 : i32
    return %arg0, %c0_i32 : i32, i32
  }
  func.func @transform_1(%arg0: i32) -> (i32, i32) {
    %c0_i32 = arith.constant 0 : i32
    %c0_i32_0 = arith.constant 0 : i32
    %c0_i32_1 = arith.constant 0 : i32
    return %c0_i32, %c0_i32_0 : i32, i32
  }
  func.func @transform_2(%arg0: i32) -> (i32, i32, i32) {
    %c0_i32 = arith.constant 0 : i32
    %c0_i32_0 = arith.constant 0 : i32
    %c0_i32_1 = arith.constant 0 : i32
    %c0_i32_2 = arith.constant 0 : i32
    return %c0_i32, %c0_i32_0, %c0_i32_1 : i32, i32, i32
  }
  func.func @transform_3(%arg0: i32) -> (i32, i32) {
    %c0_i32 = arith.constant 0 : i32
    %c0_i32_0 = arith.constant 0 : i32
    %c0_i32_1 = arith.constant 0 : i32
    return %c0_i32, %c0_i32_0 : i32, i32
  }
  func.func @transform_4(%arg0: i32) -> (i32, i32) {
    %c0_i32 = arith.constant 0 : i32
    %c0_i32_0 = arith.constant 0 : i32
    return %arg0, %c0_i32 : i32, i32
  }
}

</mosaic_0001>

<llo_original>
// kernel: tpu_custom_call.1
$region0: #{tpu_custom_call.1}
  #allocation0 [shape = 'u32[]', space=smem, size = 0x4, offset = 0x4, fixed_abs, tag = 'smem constant byte address 0x4 - core index']
  #allocation1 [shape = 'u32[144,128]{1,0:T(1,128)}', space=vmem, size = 0x12000, scoped, tag = 'internal scratch']
  %s0 = inlined_call_operand.vmem [shape: bf16[256,8], index: 0, kind: input, shape index: {}]
  %s1 = inlined_call_operand.vmem [shape: bf16[8,128], index: 1, kind: input, shape index: {}]
  %s2 = inlined_call_operand.vmem [shape: bf16[2,128,128], index: 2, kind: input, shape index: {}]
  %s3 = inlined_call_operand.vmem [shape: f32[3,128], index: 3, kind: input, shape index: {}]
  %s4 = inlined_call_operand.hbm [shape: bf16[256,128], index: 4, kind: output, shape index: {}]
  %s5 = sld [smem:[#allocation0]]
  $region26: #{tpu_custom_call.1} parent=0
    _
  %s7 = ssub.s32 1, %s5
  %s8 = scalar_select 0, %s7, %s5
  $region1: #{tpu_custom_call.1} parent=0
    #allocation2 [shape = 'u8[65536]{0}', space=vmem, size = 0x10000, scoped, tag = 'output window, operand 0, single buffered']
    #allocation3 [shape = 's32[1]{0}', space=sflag, size = 0x4, scoped, tag = 'scoped memory for tpu_custom_call.1']
    %9 = vsyncpa [#allocation3], 0
    // Predicated region
    $region2: #{tpu_custom_call.1} parent=1 // pred_check
      _
    $region3: #{tpu_custom_call.1} parent=1 // pred_check_branch
      %11 = sbr.rel (0) target = $region5
    $region4: #{tpu_custom_call.1} parent=1 // pred_region
      _
    $region5: #{tpu_custom_call.1} parent=1 // pred_fallthru
      _
    // Predicated region
    $region6: #{tpu_custom_call.1} parent=1 // pred_check
      _
    $region7: #{tpu_custom_call.1} parent=1 // pred_check_branch
      %13 = sbr.rel (0) target = $region9
    $region8: #{tpu_custom_call.1} parent=1 // pred_region
      _
    $region9: #{tpu_custom_call.1} parent=1 // pred_fallthru
      _
    // Predicated region
    $region10: #{tpu_custom_call.1} parent=1 // pred_check
      _
    $region11: #{tpu_custom_call.1} parent=1 // pred_check_branch
      %15 = sbr.rel (0) target = $region13
    $region12: #{tpu_custom_call.1} parent=1 // pred_region
      _
    $region13: #{tpu_custom_call.1} parent=1 // pred_fallthru
      _
    // Predicated region
    $region14: #{tpu_custom_call.1} parent=1 // pred_check
      _
    $region15: #{tpu_custom_call.1} parent=1 // pred_check_branch
      %17 = sbr.rel (0) target = $region17
    $region16: #{tpu_custom_call.1} parent=1 // pred_region
      _
    $region17: #{tpu_custom_call.1} parent=1 // pred_fallthru
      _
    %v19 = vld [vmem:[%s0] sm:$0xf]
    %v20 = vld [vmem:[%s0 + $0x4] sm:$0xf]
    %v21 = vld [vmem:[%s0 + $0x8] sm:$0xf]
    %v22 = vld [vmem:[%s0 + $0xc] sm:$0xf]
    %v23 = vld [vmem:[%s0 + $0x10] sm:$0xf]
    %v24 = vld [vmem:[%s0 + $0x14] sm:$0xf]
    %v25 = vld [vmem:[%s0 + $0x18] sm:$0xf]
    %v26 = vld [vmem:[%s0 + $0x1c] sm:$0xf]
    %v27 = vld [vmem:[%s0 + $0x20] sm:$0xf]
    %v28 = vld [vmem:[%s0 + $0x24] sm:$0xf]
    %v29 = vld [vmem:[%s0 + $0x28] sm:$0xf]
    %v30 = vld [vmem:[%s0 + $0x2c] sm:$0xf]
    %v31 = vld [vmem:[%s0 + $0x30] sm:$0xf]
    %v32 = vld [vmem:[%s0 + $0x34] sm:$0xf]
    %v33 = vld [vmem:[%s0 + $0x38] sm:$0xf]
    %v34 = vld [vmem:[%s0 + $0x3c] sm:$0xf]
    %v35 = vld [vmem:[%s0 + $0x40] sm:$0xf]
    %v36 = vld [vmem:[%s0 + $0x44] sm:$0xf]
    %v37 = vld [vmem:[%s0 + $0x48] sm:$0xf]
    %v38 = vld [vmem:[%s0 + $0x4c] sm:$0xf]
    %v39 = vld [vmem:[%s0 + $0x50] sm:$0xf]
    %v40 = vld [vmem:[%s0 + $0x54] sm:$0xf]
    %v41 = vld [vmem:[%s0 + $0x58] sm:$0xf]
    %v42 = vld [vmem:[%s0 + $0x5c] sm:$0xf]
    %v43 = vld [vmem:[%s0 + $0x60] sm:$0xf]
    %v44 = vld [vmem:[%s0 + $0x64] sm:$0xf]
    %v45 = vld [vmem:[%s0 + $0x68] sm:$0xf]
    %v46 = vld [vmem:[%s0 + $0x6c] sm:$0xf]
    %v47 = vld [vmem:[%s0 + $0x70] sm:$0xf]
    %v48 = vld [vmem:[%s0 + $0x74] sm:$0xf]
    %v49 = vld [vmem:[%s0 + $0x78] sm:$0xf]
    %v50 = vld [vmem:[%s0 + $0x7c] sm:$0xf]
    %v51 = vld [vmem:[%s3] sm:$0x7]
    %v52 = vld [vmem:[%s1] sm:$0xf]
    %v53 = vlaneseq
    %v54 = vshrl.u32 %v53, 7
    %v55 = vsub.s32 0, %v54
    %v56 = vrot.slane %v51, %v55
    %v89 = vunpack.c.l.b16 %v19
    %v90 = vunpack.c.l.b16 %v20
    %v91 = vunpack.c.l.b16 %v21
    %v92 = vunpack.c.l.b16 %v22
    %v93 = vunpack.c.l.b16 %v23
    %v94 = vunpack.c.l.b16 %v24
    %v95 = vunpack.c.l.b16 %v25
    %v96 = vunpack.c.l.b16 %v26
    %v97 = vunpack.c.l.b16 %v27
    %v98 = vunpack.c.l.b16 %v28
    %v99 = vunpack.c.l.b16 %v29
    %v100 = vunpack.c.l.b16 %v30
    %v101 = vunpack.c.l.b16 %v31
    %v102 = vunpack.c.l.b16 %v32
    %v103 = vunpack.c.l.b16 %v33
    %v104 = vunpack.c.l.b16 %v34
    %v105 = vunpack.c.l.b16 %v35
    %v106 = vunpack.c.l.b16 %v36
    %v107 = vunpack.c.l.b16 %v37
    %v108 = vunpack.c.l.b16 %v38
    %v109 = vunpack.c.l.b16 %v39
    %v110 = vunpack.c.l.b16 %v40
    %v111 = vunpack.c.l.b16 %v41
    %v112 = vunpack.c.l.b16 %v42
    %v113 = vunpack.c.l.b16 %v43
    %v114 = vunpack.c.l.b16 %v44
    %v115 = vunpack.c.l.b16 %v45
    %v116 = vunpack.c.l.b16 %v46
    %v117 = vunpack.c.l.b16 %v47
    %v118 = vunpack.c.l.b16 %v48
    %v119 = vunpack.c.l.b16 %v49
    %v120 = vunpack.c.l.b16 %v50
    %v121 = vpack.c.b16 %v90, %v89
    %v122 = vpack.c.b16 %v92, %v91
    %v123 = vpack.c.b16 %v94, %v93
    %v124 = vpack.c.b16 %v96, %v95
    %v125 = vpack.c.b16 %v98, %v97
    %v126 = vpack.c.b16 %v100, %v99
    %v127 = vpack.c.b16 %v102, %v101
    %v128 = vpack.c.b16 %v104, %v103
    %v129 = vpack.c.b16 %v106, %v105
    %v130 = vpack.c.b16 %v108, %v107
    %v131 = vpack.c.b16 %v110, %v109
    %v132 = vpack.c.b16 %v112, %v111
    %v133 = vpack.c.b16 %v114, %v113
    %v134 = vpack.c.b16 %v116, %v115
    %v135 = vpack.c.b16 %v118, %v117
    %v136 = vpack.c.b16 %v120, %v119
    %vm137 = vcmask 64512
    %v139 = vsel %vm137, %v121, 0
    %v142 = vsel %vm137, %v122, 0
    %v145 = vsel %vm137, %v123, 0
    %v148 = vsel %vm137, %v124, 0
    %v151 = vsel %vm137, %v125, 0
    %v154 = vsel %vm137, %v126, 0
    %v157 = vsel %vm137, %v127, 0
    %v160 = vsel %vm137, %v128, 0
    %v163 = vsel %vm137, %v129, 0
    %v166 = vsel %vm137, %v130, 0
    %v169 = vsel %vm137, %v131, 0
    %v172 = vsel %vm137, %v132, 0
    %v175 = vsel %vm137, %v133, 0
    %v178 = vsel %vm137, %v134, 0
    %v181 = vsel %vm137, %v135, 0
    %v184 = vsel %vm137, %v136, 0
    %vm186 = vcmask 1043456
    %v188 = vsel %vm186, %v52, 0
    %190 = vmatprep.subr.bf16.mxu0 0
    %191 = vmatpush1.bf16.msra.mxu0 %v188
    %192 = vmatprep.subr.bf16.mxu0 0
    %193 = vmatpush1.bf16.msra.mxu0 0
    %194 = vmatprep.subr.bf16.mxu0 0
    %195 = vmatpush1.bf16.msra.mxu0 0
    %196 = vmatprep.subr.bf16.mxu0 0
    %197 = vmatpush1.bf16.msra.mxu0 0
    %198 = vmatprep.subr.bf16.mxu0 0
    %199 = vmatpush1.bf16.msra.mxu0 0
    %200 = vmatprep.subr.bf16.mxu0 0
    %201 = vmatpush1.bf16.msra.mxu0 0
    %202 = vmatprep.subr.bf16.mxu0 0
    %203 = vmatpush1.bf16.msra.mxu0 0
    %204 = vmatprep.subr.bf16.mxu0 0
    %205 = vmatpush1.bf16.msra.mxu0 0
    %206 = vmatprep.subr.bf16.mxu0 0
    %207 = vmatpush1.bf16.msra.mxu0 0
    %208 = vmatprep.subr.bf16.mxu0 0
    %209 = vmatpush1.bf16.msra.mxu0 0
    %210 = vmatprep.subr.bf16.mxu0 0
    %211 = vmatpush1.bf16.msra.mxu0 0
    %212 = vmatprep.subr.bf16.mxu0 0
    %213 = vmatpush1.bf16.msra.mxu0 0
    %214 = vmatprep.subr.bf16.mxu0 0
    %215 = vmatpush1.bf16.msra.mxu0 0
    %216 = vmatprep.subr.bf16.mxu0 0
    %217 = vmatpush1.bf16.msra.mxu0 0
    %218 = vmatprep.subr.bf16.mxu0 0
    %219 = vmatpush1.bf16.msra.mxu0 0
    %220 = vmatprep.subr.bf16.mxu0 0
    %221 = vmatpush1.bf16.msra.mxu0 0
    %222 = vmatprep.mubr.bf16.mxu0 0
    %223 = vmatmul.mubr.bf16.gmra.mrb[0].mxu0 %v139
    %v224 = vpop.f32.mrb[0].mxu0
    %v225 = vadd.f32 %v56, %v224
    %v226 = vpop.f32.mrb[0].mxu0
    %v227 = vpop.f32.mrb[0].mxu0
    %v228 = vadd.f32 %v56, %v227
    %v229 = vpop.f32.mrb[0].mxu0
    %230 = vmatprep.mubr.bf16.mxu0 0
    %231 = vmatmul.mubr.bf16.gmra.mrb[0].mxu0 %v142
    %v232 = vpop.f32.mrb[0].mxu0
    %v233 = vadd.f32 %v56, %v232
    %v234 = vpop.f32.mrb[0].mxu0
    %v235 = vpop.f32.mrb[0].mxu0
    %v236 = vadd.f32 %v56, %v235
    %v237 = vpop.f32.mrb[0].mxu0
    %238 = vmatprep.mubr.bf16.mxu0 0
    %239 = vmatmul.mubr.bf16.gmra.mrb[0].mxu0 %v145
    %v240 = vpop.f32.mrb[0].mxu0
    %v241 = vadd.f32 %v56, %v240
    %v242 = vpop.f32.mrb[0].mxu0
    %v243 = vpop.f32.mrb[0].mxu0
    %v244 = vadd.f32 %v56, %v243
    %v245 = vpop.f32.mrb[0].mxu0
    %246 = vmatprep.mubr.bf16.mxu0 0
    %247 = vmatmul.mubr.bf16.gmra.mrb[0].mxu0 %v148
    %v248 = vpop.f32.mrb[0].mxu0
    %v249 = vadd.f32 %v56, %v248
    %v250 = vpop.f32.mrb[0].mxu0
    %v251 = vpop.f32.mrb[0].mxu0
    %v252 = vadd.f32 %v56, %v251
    %v253 = vpop.f32.mrb[0].mxu0
    %254 = vmatprep.mubr.bf16.mxu0 0
    %255 = vmatmul.mubr.bf16.gmra.mrb[0].mxu0 %v151
    %v256 = vpop.f32.mrb[0].mxu0
    %v257 = vadd.f32 %v56, %v256
    %v258 = vpop.f32.mrb[0].mxu0
    %v259 = vpop.f32.mrb[0].mxu0
    %v260 = vadd.f32 %v56, %v259
    %v261 = vpop.f32.mrb[0].mxu0
    %262 = vmatprep.mubr.bf16.mxu0 0
    %263 = vmatmul.mubr.bf16.gmra.mrb[0].mxu0 %v154
    %v264 = vpop.f32.mrb[0].mxu0
    %v265 = vadd.f32 %v56, %v264
    %v266 = vpop.f32.mrb[0].mxu0
    %v267 = vpop.f32.mrb[0].mxu0
    %v268 = vadd.f32 %v56, %v267
    %v269 = vpop.f32.mrb[0].mxu0
    %270 = vmatprep.mubr.bf16.mxu0 0
    %271 = vmatmul.mubr.bf16.gmra.mrb[0].mxu0 %v157
    %v272 = vpop.f32.mrb[0].mxu0
    %v273 = vadd.f32 %v56, %v272
    %v274 = vpop.f32.mrb[0].mxu0
    %v275 = vpop.f32.mrb[0].mxu0
    %v276 = vadd.f32 %v56, %v275
    %v277 = vpop.f32.mrb[0].mxu0
    %278 = vmatprep.mubr.bf16.mxu0 0
    %279 = vmatmul.mubr.bf16.gmra.mrb[0].mxu0 %v160
    %v280 = vpop.f32.mrb[0].mxu0
    %v281 = vadd.f32 %v56, %v280
    %v282 = vpop.f32.mrb[0].mxu0
    %v283 = vpop.f32.mrb[0].mxu0
    %v284 = vadd.f32 %v56, %v283
    %v285 = vpop.f32.mrb[0].mxu0
    %286 = vmatprep.mubr.bf16.mxu0 0
    %287 = vmatmul.mubr.bf16.gmra.mrb[0].mxu0 %v163
    %v288 = vpop.f32.mrb[0].mxu0
    %v289 = vadd.f32 %v56, %v288
    %v290 = vpop.f32.mrb[0].mxu0
    %v291 = vpop.f32.mrb[0].mxu0
    %v292 = vadd.f32 %v56, %v291
    %v293 = vpop.f32.mrb[0].mxu0
    %294 = vmatprep.mubr.bf16.mxu0 0
    %295 = vmatmul.mubr.bf16.gmra.mrb[0].mxu0 %v166
    %v296 = vpop.f32.mrb[0].mxu0
    %v297 = vadd.f32 %v56, %v296
    %v298 = vpop.f32.mrb[0].mxu0
    %v299 = vpop.f32.mrb[0].mxu0
    %v300 = vadd.f32 %v56, %v299
    %v301 = vpop.f32.mrb[0].mxu0
    %302 = vmatprep.mubr.bf16.mxu0 0
    %303 = vmatmul.mubr.bf16.gmra.mrb[0].mxu0 %v169
    %v304 = vpop.f32.mrb[0].mxu0
    %v305 = vadd.f32 %v56, %v304
    %v306 = vpop.f32.mrb[0].mxu0
    %v307 = vpop.f32.mrb[0].mxu0
    %v308 = vadd.f32 %v56, %v307
    %v309 = vpop.f32.mrb[0].mxu0
    %310 = vmatprep.mubr.bf16.mxu0 0
    %311 = vmatmul.mubr.bf16.gmra.mrb[0].mxu0 %v172
    %v312 = vpop.f32.mrb[0].mxu0
    %v313 = vadd.f32 %v56, %v312
    %v314 = vpop.f32.mrb[0].mxu0
    %v315 = vpop.f32.mrb[0].mxu0
    %v316 = vadd.f32 %v56, %v315
    %v317 = vpop.f32.mrb[0].mxu0
    %318 = vmatprep.mubr.bf16.mxu0 0
    %319 = vmatmul.mubr.bf16.gmra.mrb[0].mxu0 %v175
    %v320 = vpop.f32.mrb[0].mxu0
    %v321 = vadd.f32 %v56, %v320
    %v322 = vpop.f32.mrb[0].mxu0
    %v323 = vpop.f32.mrb[0].mxu0
    %v324 = vadd.f32 %v56, %v323
    %v325 = vpop.f32.mrb[0].mxu0
    %326 = vmatprep.mubr.bf16.mxu0 0
    %327 = vmatmul.mubr.bf16.gmra.mrb[0].mxu0 %v178
    %v328 = vpop.f32.mrb[0].mxu0
    %v329 = vadd.f32 %v56, %v328
    %v330 = vpop.f32.mrb[0].mxu0
    %v331 = vpop.f32.mrb[0].mxu0
    %v332 = vadd.f32 %v56, %v331
    %v333 = vpop.f32.mrb[0].mxu0
    %334 = vmatprep.mubr.bf16.mxu0 0
    %335 = vmatmul.mubr.bf16.gmra.mrb[0].mxu0 %v181
    %v336 = vpop.f32.mrb[0].mxu0
    %v337 = vadd.f32 %v56, %v336
    %v338 = vpop.f32.mrb[0].mxu0
    %v339 = vpop.f32.mrb[0].mxu0
    %v340 = vadd.f32 %v56, %v339
    %v341 = vpop.f32.mrb[0].mxu0
    %342 = vmatprep.mubr.bf16.mxu0 0
    %343 = vmatmul.mubr.bf16.gmra.mrb[0].mxu0 %v184
    %v344 = vpop.f32.mrb[0].mxu0
    %v345 = vadd.f32 %v56, %v344
    %v346 = vpop.f32.mrb[0].mxu0
    %v347 = vpop.f32.mrb[0].mxu0
    %v348 = vadd.f32 %v56, %v347
    %v349 = vpop.f32.mrb[0].mxu0
    %350 = vdwg.mxu0
    %v351 = vmax.f32 %v225, 0.0
    %v352 = vmax.f32 %v228, 0.0
    %v353 = vmax.f32 %v233, 0.0
    %v354 = vmax.f32 %v236, 0.0
    %v355 = vmax.f32 %v241, 0.0
    %v356 = vmax.f32 %v244, 0.0
    %v357 = vmax.f32 %v249, 0.0
    %v358 = vmax.f32 %v252, 0.0
    %v359 = vmax.f32 %v257, 0.0
    %v360 = vmax.f32 %v260, 0.0
    %v361 = vmax.f32 %v265, 0.0
    %v362 = vmax.f32 %v268, 0.0
    %v363 = vmax.f32 %v273, 0.0
    %v364 = vmax.f32 %v276, 0.0
    %v365 = vmax.f32 %v281, 0.0
    %v366 = vmax.f32 %v284, 0.0
    %v367 = vmax.f32 %v289, 0.0
    %v368 = vmax.f32 %v292, 0.0
    %v369 = vmax.f32 %v297, 0.0
    %v370 = vmax.f32 %v300, 0.0
    %v371 = vmax.f32 %v305, 0.0
    %v372 = vmax.f32 %v308, 0.0
    %v373 = vmax.f32 %v313, 0.0
    %v374 = vmax.f32 %v316, 0.0
    %v375 = vmax.f32 %v321, 0.0
    %v376 = vmax.f32 %v324, 0.0
    %v377 = vmax.f32 %v329, 0.0
    %v378 = vmax.f32 %v332, 0.0
    %v379 = vmax.f32 %v337, 0.0
    %v380 = vmax.f32 %v340, 0.0
    %v381 = vmax.f32 %v345, 0.0
    %v382 = vmax.f32 %v348, 0.0
    %v383 = vpack.c.bf16 %v352, %v351
    %v384 = vpack.c.bf16 %v354, %v353
    %v385 = vpack.c.bf16 %v356, %v355
    %v386 = vpack.c.bf16 %v358, %v357
    %v387 = vpack.c.bf16 %v360, %v359
    %v388 = vpack.c.bf16 %v362, %v361
    %v389 = vpack.c.bf16 %v364, %v363
    %v390 = vpack.c.bf16 %v366, %v365
    %v391 = vpack.c.bf16 %v368, %v367
    %v392 = vpack.c.bf16 %v370, %v369
    %v393 = vpack.c.bf16 %v372, %v371
    %v394 = vpack.c.bf16 %v374, %v373
    %v395 = vpack.c.bf16 %v376, %v375
    %v396 = vpack.c.bf16 %v378, %v377
    %v397 = vpack.c.bf16 %v380, %v379
    %v398 = vpack.c.bf16 %v382, %v381
    %v399 = vld [vmem:[%s2] sm:$0xf]
    %v400 = vld [vmem:[%s2 + $0x4] sm:$0xf]
    %v401 = vld [vmem:[%s2 + $0x8] sm:$0xf]
    %v402 = vld [vmem:[%s2 + $0xc] sm:$0xf]
    %v403 = vld [vmem:[%s2 + $0x10] sm:$0xf]
    %v404 = vld [vmem:[%s2 + $0x14] sm:$0xf]
    %v405 = vld [vmem:[%s2 + $0x18] sm:$0xf]
    %v406 = vld [vmem:[%s2 + $0x1c] sm:$0xf]
    %v407 = vld [vmem:[%s2 + $0x20] sm:$0xf]
    %v408 = vld [vmem:[%s2 + $0x24] sm:$0xf]
    %v409 = vld [vmem:[%s2 + $0x28] sm:$0xf]
    %v410 = vld [vmem:[%s2 + $0x2c] sm:$0xf]
    %v411 = vld [vmem:[%s2 + $0x30] sm:$0xf]
    %v412 = vld [vmem:[%s2 + $0x34] sm:$0xf]
    %v413 = vld [vmem:[%s2 + $0x38] sm:$0xf]
    %v414 = vld [vmem:[%s2 + $0x3c] sm:$0xf]
    %v415 = vlaneseq
    %v416 = vshrl.u32 %v415, 7
    %v417 = vsub.s32 1, %v416
    %v418 = vrot.slane %v51, %v417
    %v435 = vunpack.c.l.b16 %v399
    %v436 = vunpack.c.l.b16 %v400
    %v437 = vunpack.c.l.b16 %v401
    %v438 = vunpack.c.l.b16 %v402
    %v439 = vunpack.c.l.b16 %v403
    %v440 = vunpack.c.l.b16 %v404
    %v441 = vunpack.c.l.b16 %v405
    %v442 = vunpack.c.l.b16 %v406
    %v443 = vunpack.c.l.b16 %v407
    %v444 = vunpack.c.l.b16 %v408
    %v445 = vunpack.c.l.b16 %v409
    %v446 = vunpack.c.l.b16 %v410
    %v447 = vunpack.c.l.b16 %v411
    %v448 = vunpack.c.l.b16 %v412
    %v449 = vunpack.c.l.b16 %v413
    %v450 = vunpack.c.l.b16 %v414
    %v451 = vpack.c.b16 %v436, %v435
    %v452 = vpack.c.b16 %v438, %v437
    %v453 = vpack.c.b16 %v440, %v439
    %v454 = vpack.c.b16 %v442, %v441
    %v455 = vpack.c.b16 %v444, %v443
    %v456 = vpack.c.b16 %v446, %v445
    %v457 = vpack.c.b16 %v448, %v447
    %v458 = vpack.c.b16 %v450, %v449
    %467 = vmatprep.subr.bf16.mxu0 0
    %468 = vmatpush1.bf16.msra.mxu0 %v451
    %469 = vmatprep.subr.bf16.mxu0 0
    %470 = vmatpush1.bf16.msra.mxu0 %v452
    %471 = vmatprep.subr.bf16.mxu0 0
    %472 = vmatpush1.bf16.msra.mxu0 %v453
    %473 = vmatprep.subr.bf16.mxu0 0
    %474 = vmatpush1.bf16.msra.mxu0 %v454
    %475 = vmatprep.subr.bf16.mxu0 0
    %476 = vmatpush1.bf16.msra.mxu0 %v455
    %477 = vmatprep.subr.bf16.mxu0 0
    %478 = vmatpush1.bf16.msra.mxu0 %v456
    %479 = vmatprep.subr.bf16.mxu0 0
    %480 = vmatpush1.bf16.msra.mxu0 %v457
    %481 = vmatprep.subr.bf16.mxu0 0
    %482 = vmatpush1.bf16.msra.mxu0 %v458
    %483 = vmatprep.subr.bf16.mxu0 0
    %484 = vmatpush1.bf16.msra.mxu0 0
    %485 = vmatprep.subr.bf16.mxu0 0
    %486 = vmatpush1.bf16.msra.mxu0 0
    %487 = vmatprep.subr.bf16.mxu0 0
    %488 = vmatpush1.bf16.msra.mxu0 0
    %489 = vmatprep.subr.bf16.mxu0 0
    %490 = vmatpush1.bf16.msra.mxu0 0
    %491 = vmatprep.subr.bf16.mxu0 0
    %492 = vmatpush1.bf16.msra.mxu0 0
    %493 = vmatprep.subr.bf16.mxu0 0
    %494 = vmatpush1.bf16.msra.mxu0 0
    %495 = vmatprep.subr.bf16.mxu0 0
    %496 = vmatpush1.bf16.msra.mxu0 0
    %497 = vmatprep.subr.bf16.mxu0 0
    %498 = vmatpush1.bf16.msra.mxu0 0
    %499 = vmatprep.mubr.bf16.mxu0 0
    %500 = vmatmul.mubr.bf16.gmra.mrb[0].mxu0 %v383
    %v501 = vpop.f32.mrb[0].mxu0
    %v502 = vadd.f32 %v418, %v501
    %v503 = vpop.f32.mrb[0].mxu0
    %v504 = vpop.f32.mrb[0].mxu0
    %v505 = vadd.f32 %v418, %v504
    %v506 = vpop.f32.mrb[0].mxu0
    %507 = vmatprep.mubr.bf16.mxu0 0
    %508 = vmatmul.mubr.bf16.gmra.mrb[0].mxu0 %v384
    %v509 = vpop.f32.mrb[0].mxu0
    %v510 = vadd.f32 %v418, %v509
    %v511 = vpop.f32.mrb[0].mxu0
    %v512 = vpop.f32.mrb[0].mxu0
    %v513 = vadd.f32 %v418, %v512
    %v514 = vpop.f32.mrb[0].mxu0
    %515 = vmatprep.mubr.bf16.mxu0 0
    %516 = vmatmul.mubr.bf16.gmra.mrb[0].mxu0 %v385
    %v517 = vpop.f32.mrb[0].mxu0
    %v518 = vadd.f32 %v418, %v517
    %v519 = vpop.f32.mrb[0].mxu0
    %v520 = vpop.f32.mrb[0].mxu0
    %v521 = vadd.f32 %v418, %v520
    %v522 = vpop.f32.mrb[0].mxu0
    %523 = vmatprep.mubr.bf16.mxu0 0
    %524 = vmatmul.mubr.bf16.gmra.mrb[0].mxu0 %v386
    %v525 = vpop.f32.mrb[0].mxu0
    %v526 = vadd.f32 %v418, %v525
    %v527 = vpop.f32.mrb[0].mxu0
    %v528 = vpop.f32.mrb[0].mxu0
    %v529 = vadd.f32 %v418, %v528
    %v530 = vpop.f32.mrb[0].mxu0
    %531 = vmatprep.mubr.bf16.mxu0 0
    %532 = vmatmul.mubr.bf16.gmra.mrb[0].mxu0 %v387
    %v533 = vpop.f32.mrb[0].mxu0
    %v534 = vadd.f32 %v418, %v533
    %v535 = vpop.f32.mrb[0].mxu0
    %v536 = vpop.f32.mrb[0].mxu0
    %v537 = vadd.f32 %v418, %v536
    %v538 = vpop.f32.mrb[0].mxu0
    %539 = vmatprep.mubr.bf16.mxu0 0
    %540 = vmatmul.mubr.bf16.gmra.mrb[0].mxu0 %v388
    %v541 = vpop.f32.mrb[0].mxu0
    %v542 = vadd.f32 %v418, %v541
    %v543 = vpop.f32.mrb[0].mxu0
    %v544 = vpop.f32.mrb[0].mxu0
    %v545 = vadd.f32 %v418, %v544
    %v546 = vpop.f32.mrb[0].mxu0
    %547 = vmatprep.mubr.bf16.mxu0 0
    %548 = vmatmul.mubr.bf16.gmra.mrb[0].mxu0 %v389
    %v549 = vpop.f32.mrb[0].mxu0
    %v550 = vadd.f32 %v418, %v549
    %v551 = vpop.f32.mrb[0].mxu0
    %v552 = vpop.f32.mrb[0].mxu0
    %v553 = vadd.f32 %v418, %v552
    %v554 = vpop.f32.mrb[0].mxu0
    %555 = vmatprep.mubr.bf16.mxu0 0
    %556 = vmatmul.mubr.bf16.gmra.mrb[0].mxu0 %v390
    %v557 = vpop.f32.mrb[0].mxu0
    %v558 = vadd.f32 %v418, %v557
    %v559 = vpop.f32.mrb[0].mxu0
    %v560 = vpop.f32.mrb[0].mxu0
    %v561 = vadd.f32 %v418, %v560
    %v562 = vpop.f32.mrb[0].mxu0
    %563 = vmatprep.mubr.bf16.mxu0 0
    %564 = vmatmul.mubr.bf16.gmra.mrb[0].mxu0 %v391
    %v565 = vpop.f32.mrb[0].mxu0
    %v566 = vadd.f32 %v418, %v565
    %v567 = vpop.f32.mrb[0].mxu0
    %v568 = vpop.f32.mrb[0].mxu0
    %v569 = vadd.f32 %v418, %v568
    %v570 = vpop.f32.mrb[0].mxu0
    %571 = vmatprep.mubr.bf16.mxu0 0
    %572 = vmatmul.mubr.bf16.gmra.mrb[0].mxu0 %v392
    %v573 = vpop.f32.mrb[0].mxu0
    %v574 = vadd.f32 %v418, %v573
    %v575 = vpop.f32.mrb[0].mxu0
    %v576 = vpop.f32.mrb[0].mxu0
    %v577 = vadd.f32 %v418, %v576
    %v578 = vpop.f32.mrb[0].mxu0
    %579 = vmatprep.mubr.bf16.mxu0 0
    %580 = vmatmul.mubr.bf16.gmra.mrb[0].mxu0 %v393
    %v581 = vpop.f32.mrb[0].mxu0
    %v582 = vadd.f32 %v418, %v581
    %v583 = vpop.f32.mrb[0].mxu0
    %v584 = vpop.f32.mrb[0].mxu0
    %v585 = vadd.f32 %v418, %v584
    %v586 = vpop.f32.mrb[0].mxu0
    %587 = vmatprep.mubr.bf16.mxu0 0
    %588 = vmatmul.mubr.bf16.gmra.mrb[0].mxu0 %v394
    %v589 = vpop.f32.mrb[0].mxu0
    %v590 = vadd.f32 %v418, %v589
    %v591 = vpop.f32.mrb[0].mxu0
    %v592 = vpop.f32.mrb[0].mxu0
    %v593 = vadd.f32 %v418, %v592
    %v594 = vpop.f32.mrb[0].mxu0
    %595 = vmatprep.mubr.bf16.mxu0 0
    %596 = vmatmul.mubr.bf16.gmra.mrb[0].mxu0 %v395
    %v597 = vpop.f32.mrb[0].mxu0
    %v598 = vadd.f32 %v418, %v597
    %v599 = vpop.f32.mrb[0].mxu0
    %v600 = vpop.f32.mrb[0].mxu0
    %v601 = vadd.f32 %v418, %v600
    %v602 = vpop.f32.mrb[0].mxu0
    %603 = vmatprep.mubr.bf16.mxu0 0
    %604 = vmatmul.mubr.bf16.gmra.mrb[0].mxu0 %v396
    %v605 = vpop.f32.mrb[0].mxu0
    %v606 = vadd.f32 %v418, %v605
    %v607 = vpop.f32.mrb[0].mxu0
    %v608 = vpop.f32.mrb[0].mxu0
    %v609 = vadd.f32 %v418, %v608
    %v610 = vpop.f32.mrb[0].mxu0
    %611 = vmatprep.mubr.bf16.mxu0 0
    %612 = vmatmul.mubr.bf16.gmra.mrb[0].mxu0 %v397
    %v613 = vpop.f32.mrb[0].mxu0
    %v614 = vadd.f32 %v418, %v613
    %v615 = vpop.f32.mrb[0].mxu0
    %v616 = vpop.f32.mrb[0].mxu0
    %v617 = vadd.f32 %v418, %v616
    %v618 = vpop.f32.mrb[0].mxu0
    %619 = vmatprep.mubr.bf16.mxu0 0
    %620 = vmatmul.mubr.bf16.gmra.mrb[0].mxu0 %v398
    %v621 = vpop.f32.mrb[0].mxu0
    %v622 = vadd.f32 %v418, %v621
    %v623 = vpop.f32.mrb[0].mxu0
    %v624 = vpop.f32.mrb[0].mxu0
    %v625 = vadd.f32 %v418, %v624
    %v626 = vpop.f32.mrb[0].mxu0
    %627 = vdwg.mxu0
    %v628 = vmax.f32 %v502, 0.0
    %v629 = vmax.f32 %v505, 0.0
    %v630 = vmax.f32 %v510, 0.0
    %v631 = vmax.f32 %v513, 0.0
    %v632 = vmax.f32 %v518, 0.0
    %v633 = vmax.f32 %v521, 0.0
    %v634 = vmax.f32 %v526, 0.0
    %v635 = vmax.f32 %v529, 0.0
    %v636 = vmax.f32 %v534, 0.0
    %v637 = vmax.f32 %v537, 0.0
    %v638 = vmax.f32 %v542, 0.0
    %v639 = vmax.f32 %v545, 0.0
    %v640 = vmax.f32 %v550, 0.0
    %v641 = vmax.f32 %v553, 0.0
    %v642 = vmax.f32 %v558, 0.0
    %v643 = vmax.f32 %v561, 0.0
    %v644 = vmax.f32 %v566, 0.0
    %v645 = vmax.f32 %v569, 0.0
    %v646 = vmax.f32 %v574, 0.0
    %v647 = vmax.f32 %v577, 0.0
    %v648 = vmax.f32 %v582, 0.0
    %v649 = vmax.f32 %v585, 0.0
    %v650 = vmax.f32 %v590, 0.0
    %v651 = vmax.f32 %v593, 0.0
    %v652 = vmax.f32 %v598, 0.0
    %v653 = vmax.f32 %v601, 0.0
    %v654 = vmax.f32 %v606, 0.0
    %v655 = vmax.f32 %v609, 0.0
    %v656 = vmax.f32 %v614, 0.0
    %v657 = vmax.f32 %v617, 0.0
    %v658 = vmax.f32 %v622, 0.0
    %v659 = vmax.f32 %v625, 0.0
    %v660 = vpack.c.bf16 %v629, %v628
    %v661 = vpack.c.bf16 %v631, %v630
    %v662 = vpack.c.bf16 %v633, %v632
    %v663 = vpack.c.bf16 %v635, %v634
    %v664 = vpack.c.bf16 %v637, %v636
    %v665 = vpack.c.bf16 %v639, %v638
    %v666 = vpack.c.bf16 %v641, %v640
    %v667 = vpack.c.bf16 %v643, %v642
    %v668 = vpack.c.bf16 %v645, %v644
    %v669 = vpack.c.bf16 %v647, %v646
    %v670 = vpack.c.bf16 %v649, %v648
    %v671 = vpack.c.bf16 %v651, %v650
    %v672 = vpack.c.bf16 %v653, %v652
    %v673 = vpack.c.bf16 %v655, %v654
    %v674 = vpack.c.bf16 %v657, %v656
    %v675 = vpack.c.bf16 %v659, %v658
    %s676 = scalar_lea.vmem %s2, 64
    %v677 = vld [vmem:[%s676] sm:$0xf]
    %v678 = vld [vmem:[%s676 + $0x4] sm:$0xf]
    %v679 = vld [vmem:[%s676 + $0x8] sm:$0xf]
    %v680 = vld [vmem:[%s676 + $0xc] sm:$0xf]
    %v681 = vld [vmem:[%s676 + $0x10] sm:$0xf]
    %v682 = vld [vmem:[%s676 + $0x14] sm:$0xf]
    %v683 = vld [vmem:[%s676 + $0x18] sm:$0xf]
    %v684 = vld [vmem:[%s676 + $0x1c] sm:$0xf]
    %v685 = vld [vmem:[%s676 + $0x20] sm:$0xf]
    %v686 = vld [vmem:[%s676 + $0x24] sm:$0xf]
    %v687 = vld [vmem:[%s676 + $0x28] sm:$0xf]
    %v688 = vld [vmem:[%s676 + $0x2c] sm:$0xf]
    %v689 = vld [vmem:[%s676 + $0x30] sm:$0xf]
    %v690 = vld [vmem:[%s676 + $0x34] sm:$0xf]
    %v691 = vld [vmem:[%s676 + $0x38] sm:$0xf]
    %v692 = vld [vmem:[%s676 + $0x3c] sm:$0xf]
    %v693 = vlaneseq
    %v694 = vshrl.u32 %v693, 7
    %v695 = vsub.s32 2, %v694
    %v696 = vrot.slane %v51, %v695
    %v713 = vunpack.c.l.b16 %v677
    %v714 = vunpack.c.l.b16 %v678
    %v715 = vunpack.c.l.b16 %v679
    %v716 = vunpack.c.l.b16 %v680
    %v717 = vunpack.c.l.b16 %v681
    %v718 = vunpack.c.l.b16 %v682
    %v719 = vunpack.c.l.b16 %v683
    %v720 = vunpack.c.l.b16 %v684
    %v721 = vunpack.c.l.b16 %v685
    %v722 = vunpack.c.l.b16 %v686
    %v723 = vunpack.c.l.b16 %v687
    %v724 = vunpack.c.l.b16 %v688
    %v725 = vunpack.c.l.b16 %v689
    %v726 = vunpack.c.l.b16 %v690
    %v727 = vunpack.c.l.b16 %v691
    %v728 = vunpack.c.l.b16 %v692
    %v729 = vpack.c.b16 %v714, %v713
    %v730 = vpack.c.b16 %v716, %v715
    %v731 = vpack.c.b16 %v718, %v717
    %v732 = vpack.c.b16 %v720, %v719
    %v733 = vpack.c.b16 %v722, %v721
    %v734 = vpack.c.b16 %v724, %v723
    %v735 = vpack.c.b16 %v726, %v725
    %v736 = vpack.c.b16 %v728, %v727
    %745 = vmatprep.subr.bf16.mxu0 0
    %746 = vmatpush1.bf16.msra.mxu0 %v729
    %747 = vmatprep.subr.bf16.mxu0 0
    %748 = vmatpush1.bf16.msra.mxu0 %v730
    %749 = vmatprep.subr.bf16.mxu0 0
    %750 = vmatpush1.bf16.msra.mxu0 %v731
    %751 = vmatprep.subr.bf16.mxu0 0
    %752 = vmatpush1.bf16.msra.mxu0 %v732
    %753 = vmatprep.subr.bf16.mxu0 0
    %754 = vmatpush1.bf16.msra.mxu0 %v733
    %755 = vmatprep.subr.bf16.mxu0 0
    %756 = vmatpush1.bf16.msra.mxu0 %v734
    %757 = vmatprep.subr.bf16.mxu0 0
    %758 = vmatpush1.bf16.msra.mxu0 %v735
    %759 = vmatprep.subr.bf16.mxu0 0
    %760 = vmatpush1.bf16.msra.mxu0 %v736
    %761 = vmatprep.subr.bf16.mxu0 0
    %762 = vmatpush1.bf16.msra.mxu0 0
    %763 = vmatprep.subr.bf16.mxu0 0
    %764 = vmatpush1.bf16.msra.mxu0 0
    %765 = vmatprep.subr.bf16.mxu0 0
    %766 = vmatpush1.bf16.msra.mxu0 0
    %767 = vmatprep.subr.bf16.mxu0 0
    %768 = vmatpush1.bf16.msra.mxu0 0
    %769 = vmatprep.subr.bf16.mxu0 0
    %770 = vmatpush1.bf16.msra.mxu0 0
    %771 = vmatprep.subr.bf16.mxu0 0
    %772 = vmatpush1.bf16.msra.mxu0 0
    %773 = vmatprep.subr.bf16.mxu0 0
    %774 = vmatpush1.bf16.msra.mxu0 0
    %775 = vmatprep.subr.bf16.mxu0 0
    %776 = vmatpush1.bf16.msra.mxu0 0
    %777 = vmatprep.mubr.bf16.mxu0 0
    %778 = vmatmul.mubr.bf16.gmra.mrb[0].mxu0 %v660
    %v779 = vpop.f32.mrb[0].mxu0
    %v780 = vadd.f32 %v696, %v779
    %v781 = vpop.f32.mrb[0].mxu0
    %v782 = vpop.f32.mrb[0].mxu0
    %v783 = vadd.f32 %v696, %v782
    %v784 = vpop.f32.mrb[0].mxu0
    %785 = vmatprep.mubr.bf16.mxu0 0
    %786 = vmatmul.mubr.bf16.gmra.mrb[0].mxu0 %v661
    %v787 = vpop.f32.mrb[0].mxu0
    %v788 = vadd.f32 %v696, %v787
    %v789 = vpop.f32.mrb[0].mxu0
    %v790 = vpop.f32.mrb[0].mxu0
    %v791 = vadd.f32 %v696, %v790
    %v792 = vpop.f32.mrb[0].mxu0
    %793 = vmatprep.mubr.bf16.mxu0 0
    %794 = vmatmul.mubr.bf16.gmra.mrb[0].mxu0 %v662
    %v795 = vpop.f32.mrb[0].mxu0
    %v796 = vadd.f32 %v696, %v795
    %v797 = vpop.f32.mrb[0].mxu0
    %v798 = vpop.f32.mrb[0].mxu0
    %v799 = vadd.f32 %v696, %v798
    %v800 = vpop.f32.mrb[0].mxu0
    %801 = vmatprep.mubr.bf16.mxu0 0
    %802 = vmatmul.mubr.bf16.gmra.mrb[0].mxu0 %v663
    %v803 = vpop.f32.mrb[0].mxu0
    %v804 = vadd.f32 %v696, %v803
    %v805 = vpop.f32.mrb[0].mxu0
    %v806 = vpop.f32.mrb[0].mxu0
    %v807 = vadd.f32 %v696, %v806
    %v808 = vpop.f32.mrb[0].mxu0
    %809 = vmatprep.mubr.bf16.mxu0 0
    %810 = vmatmul.mubr.bf16.gmra.mrb[0].mxu0 %v664
    %v811 = vpop.f32.mrb[0].mxu0
    %v812 = vadd.f32 %v696, %v811
    %v813 = vpop.f32.mrb[0].mxu0
    %v814 = vpop.f32.mrb[0].mxu0
    %v815 = vadd.f32 %v696, %v814
    %v816 = vpop.f32.mrb[0].mxu0
    %817 = vmatprep.mubr.bf16.mxu0 0
    %818 = vmatmul.mubr.bf16.gmra.mrb[0].mxu0 %v665
    %v819 = vpop.f32.mrb[0].mxu0
    %v820 = vadd.f32 %v696, %v819
    %v821 = vpop.f32.mrb[0].mxu0
    %v822 = vpop.f32.mrb[0].mxu0
    %v823 = vadd.f32 %v696, %v822
    %v824 = vpop.f32.mrb[0].mxu0
    %825 = vmatprep.mubr.bf16.mxu0 0
    %826 = vmatmul.mubr.bf16.gmra.mrb[0].mxu0 %v666
    %v827 = vpop.f32.mrb[0].mxu0
    %v828 = vadd.f32 %v696, %v827
    %v829 = vpop.f32.mrb[0].mxu0
    %v830 = vpop.f32.mrb[0].mxu0
    %v831 = vadd.f32 %v696, %v830
    %v832 = vpop.f32.mrb[0].mxu0
    %833 = vmatprep.mubr.bf16.mxu0 0
    %834 = vmatmul.mubr.bf16.gmra.mrb[0].mxu0 %v667
    %v835 = vpop.f32.mrb[0].mxu0
    %v836 = vadd.f32 %v696, %v835
    %v837 = vpop.f32.mrb[0].mxu0
    %v838 = vpop.f32.mrb[0].mxu0
    %v839 = vadd.f32 %v696, %v838
    %v840 = vpop.f32.mrb[0].mxu0
    %841 = vmatprep.mubr.bf16.mxu0 0
    %842 = vmatmul.mubr.bf16.gmra.mrb[0].mxu0 %v668
    %v843 = vpop.f32.mrb[0].mxu0
    %v844 = vadd.f32 %v696, %v843
    %v845 = vpop.f32.mrb[0].mxu0
    %v846 = vpop.f32.mrb[0].mxu0
    %v847 = vadd.f32 %v696, %v846
    %v848 = vpop.f32.mrb[0].mxu0
    %849 = vmatprep.mubr.bf16.mxu0 0
    %850 = vmatmul.mubr.bf16.gmra.mrb[0].mxu0 %v669
    %v851 = vpop.f32.mrb[0].mxu0
    %v852 = vadd.f32 %v696, %v851
    %v853 = vpop.f32.mrb[0].mxu0
    %v854 = vpop.f32.mrb[0].mxu0
    %v855 = vadd.f32 %v696, %v854
    %v856 = vpop.f32.mrb[0].mxu0
    %857 = vmatprep.mubr.bf16.mxu0 0
    %858 = vmatmul.mubr.bf16.gmra.mrb[0].mxu0 %v670
    %v859 = vpop.f32.mrb[0].mxu0
    %v860 = vadd.f32 %v696, %v859
    %v861 = vpop.f32.mrb[0].mxu0
    %v862 = vpop.f32.mrb[0].mxu0
    %v863 = vadd.f32 %v696, %v862
    %v864 = vpop.f32.mrb[0].mxu0
    %865 = vmatprep.mubr.bf16.mxu0 0
    %866 = vmatmul.mubr.bf16.gmra.mrb[0].mxu0 %v671
    %v867 = vpop.f32.mrb[0].mxu0
    %v868 = vadd.f32 %v696, %v867
    %v869 = vpop.f32.mrb[0].mxu0
    %v870 = vpop.f32.mrb[0].mxu0
    %v871 = vadd.f32 %v696, %v870
    %v872 = vpop.f32.mrb[0].mxu0
    %873 = vmatprep.mubr.bf16.mxu0 0
    %874 = vmatmul.mubr.bf16.gmra.mrb[0].mxu0 %v672
    %v875 = vpop.f32.mrb[0].mxu0
    %v876 = vadd.f32 %v696, %v875
    %v877 = vpop.f32.mrb[0].mxu0
    %v878 = vpop.f32.mrb[0].mxu0
    %v879 = vadd.f32 %v696, %v878
    %v880 = vpop.f32.mrb[0].mxu0
    %881 = vmatprep.mubr.bf16.mxu0 0
    %882 = vmatmul.mubr.bf16.gmra.mrb[0].mxu0 %v673
    %v883 = vpop.f32.mrb[0].mxu0
    %v884 = vadd.f32 %v696, %v883
    %v885 = vpop.f32.mrb[0].mxu0
    %v886 = vpop.f32.mrb[0].mxu0
    %v887 = vadd.f32 %v696, %v886
    %v888 = vpop.f32.mrb[0].mxu0
    %889 = vmatprep.mubr.bf16.mxu0 0
    %890 = vmatmul.mubr.bf16.gmra.mrb[0].mxu0 %v674
    %v891 = vpop.f32.mrb[0].mxu0
    %v892 = vadd.f32 %v696, %v891
    %v893 = vpop.f32.mrb[0].mxu0
    %v894 = vpop.f32.mrb[0].mxu0
    %v895 = vadd.f32 %v696, %v894
    %v896 = vpop.f32.mrb[0].mxu0
    %897 = vmatprep.mubr.bf16.mxu0 0
    %898 = vmatmul.mubr.bf16.gmra.mrb[0].mxu0 %v675
    %v899 = vpop.f32.mrb[0].mxu0
    %v900 = vadd.f32 %v696, %v899
    %v901 = vpop.f32.mrb[0].mxu0
    %v902 = vpop.f32.mrb[0].mxu0
    %v903 = vadd.f32 %v696, %v902
    %v904 = vpop.f32.mrb[0].mxu0
    %905 = vdwg.mxu0
    %v906 = vpack.c.bf16 %v783, %v780
    %v907 = vpack.c.bf16 %v791, %v788
    %v908 = vpack.c.bf16 %v799, %v796
    %v909 = vpack.c.bf16 %v807, %v804
    %v910 = vpack.c.bf16 %v815, %v812
    %v911 = vpack.c.bf16 %v823, %v820
    %v912 = vpack.c.bf16 %v831, %v828
    %v913 = vpack.c.bf16 %v839, %v836
    %v914 = vpack.c.bf16 %v847, %v844
    %v915 = vpack.c.bf16 %v855, %v852
    %v916 = vpack.c.bf16 %v863, %v860
    %v917 = vpack.c.bf16 %v871, %v868
    %v918 = vpack.c.bf16 %v879, %v876
    %v919 = vpack.c.bf16 %v887, %v884
    %v920 = vpack.c.bf16 %v895, %v892
    %v921 = vpack.c.bf16 %v903, %v900
    %v938 = vunpack.c.l.b16 %v906
    %v939 = vunpack.c.h.b16 %v906
    %v940 = vunpack.c.l.b16 %v907
    %v941 = vunpack.c.h.b16 %v907
    %v942 = vunpack.c.l.b16 %v908
    %v943 = vunpack.c.h.b16 %v908
    %v944 = vunpack.c.l.b16 %v909
    %v945 = vunpack.c.h.b16 %v909
    %v946 = vunpack.c.l.b16 %v910
    %v947 = vunpack.c.h.b16 %v910
    %v948 = vunpack.c.l.b16 %v911
    %v949 = vunpack.c.h.b16 %v911
    %v950 = vunpack.c.l.b16 %v912
    %v951 = vunpack.c.h.b16 %v912
    %v952 = vunpack.c.l.b16 %v913
    %v953 = vunpack.c.h.b16 %v913
    %v954 = vunpack.c.l.b16 %v914
    %v955 = vunpack.c.h.b16 %v914
    %v956 = vunpack.c.l.b16 %v915
    %v957 = vunpack.c.h.b16 %v915
    %v958 = vunpack.c.l.b16 %v916
    %v959 = vunpack.c.h.b16 %v916
    %v960 = vunpack.c.l.b16 %v917
    %v961 = vunpack.c.h.b16 %v917
    %v962 = vunpack.c.l.b16 %v918
    %v963 = vunpack.c.h.b16 %v918
    %v964 = vunpack.c.l.b16 %v919
    %v965 = vunpack.c.h.b16 %v919
    %v966 = vunpack.c.l.b16 %v920
    %v967 = vunpack.c.h.b16 %v920
    %v968 = vunpack.c.l.b16 %v921
    %v969 = vunpack.c.h.b16 %v921
    %v970 = vpack.c.b16 %v938, %v938
    %v971 = vpack.c.b16 %v939, %v939
    %v972 = vpack.c.b16 %v940, %v940
    %v973 = vpack.c.b16 %v941, %v941
    %v974 = vpack.c.b16 %v942, %v942
    %v975 = vpack.c.b16 %v943, %v943
    %v976 = vpack.c.b16 %v944, %v944
    %v977 = vpack.c.b16 %v945, %v945
    %v978 = vpack.c.b16 %v946, %v946
    %v979 = vpack.c.b16 %v947, %v947
    %v980 = vpack.c.b16 %v948, %v948
    %v981 = vpack.c.b16 %v949, %v949
    %v982 = vpack.c.b16 %v950, %v950
    %v983 = vpack.c.b16 %v951, %v951
    %v984 = vpack.c.b16 %v952, %v952
    %v985 = vpack.c.b16 %v953, %v953
    %v986 = vpack.c.b16 %v954, %v954
    %v987 = vpack.c.b16 %v955, %v955
    %v988 = vpack.c.b16 %v956, %v956
    %v989 = vpack.c.b16 %v957, %v957
    %v990 = vpack.c.b16 %v958, %v958
    %v991 = vpack.c.b16 %v959, %v959
    %v992 = vpack.c.b16 %v960, %v960
    %v993 = vpack.c.b16 %v961, %v961
    %v994 = vpack.c.b16 %v962, %v962
    %v995 = vpack.c.b16 %v963, %v963
    %v996 = vpack.c.b16 %v964, %v964
    %v997 = vpack.c.b16 %v965, %v965
    %v998 = vpack.c.b16 %v966, %v966
    %v999 = vpack.c.b16 %v967, %v967
    %v1000 = vpack.c.b16 %v968, %v968
    %v1001 = vpack.c.b16 %v969, %v969
    %1034 = vst [vmem:[#allocation2] sm:$0xf] %v970
    %1035 = vst [vmem:[#allocation2 + $0x4] sm:$0xf] %v971
    %1036 = vst [vmem:[#allocation2 + $0x8] sm:$0xf] %v972
    %1037 = vst [vmem:[#allocation2 + $0xc] sm:$0xf] %v973
    %1038 = vst [vmem:[#allocation2 + $0x10] sm:$0xf] %v974
    %1039 = vst [vmem:[#allocation2 + $0x14] sm:$0xf] %v975
    %1040 = vst [vmem:[#allocation2 + $0x18] sm:$0xf] %v976
    %1041 = vst [vmem:[#allocation2 + $0x1c] sm:$0xf] %v977
    %1042 = vst [vmem:[#allocation2 + $0x20] sm:$0xf] %v978
    %1043 = vst [vmem:[#allocation2 + $0x24] sm:$0xf] %v979
    %1044 = vst [vmem:[#allocation2 + $0x28] sm:$0xf] %v980
    %1045 = vst [vmem:[#allocation2 + $0x2c] sm:$0xf] %v981
    %1046 = vst [vmem:[#allocation2 + $0x30] sm:$0xf] %v982
    %1047 = vst [vmem:[#allocation2 + $0x34] sm:$0xf] %v983
    %1048 = vst [vmem:[#allocation2 + $0x38] sm:$0xf] %v984
    %1049 = vst [vmem:[#allocation2 + $0x3c] sm:$0xf] %v985
    %1050 = vst [vmem:[#allocation2 + $0x40] sm:$0xf] %v986
    %1051 = vst [vmem:[#allocation2 + $0x44] sm:$0xf] %v987
    %1052 = vst [vmem:[#allocation2 + $0x48] sm:$0xf] %v988
    %1053 = vst [vmem:[#allocation2 + $0x4c] sm:$0xf] %v989
    %1054 = vst [vmem:[#allocation2 + $0x50] sm:$0xf] %v990
    %1055 = vst [vmem:[#allocation2 + $0x54] sm:$0xf] %v991
    %1056 = vst [vmem:[#allocation2 + $0x58] sm:$0xf] %v992
    %1057 = vst [vmem:[#allocation2 + $0x5c] sm:$0xf] %v993
    %1058 = vst [vmem:[#allocation2 + $0x60] sm:$0xf] %v994
    %1059 = vst [vmem:[#allocation2 + $0x64] sm:$0xf] %v995
    %1060 = vst [vmem:[#allocation2 + $0x68] sm:$0xf] %v996
    %1061 = vst [vmem:[#allocation2 + $0x6c] sm:$0xf] %v997
    %1062 = vst [vmem:[#allocation2 + $0x70] sm:$0xf] %v998
    %1063 = vst [vmem:[#allocation2 + $0x74] sm:$0xf] %v999
    %1064 = vst [vmem:[#allocation2 + $0x78] sm:$0xf] %v1000
    %1065 = vst [vmem:[#allocation2 + $0x7c] sm:$0xf] %v1001
    // Predicated region
    $region18: #{tpu_custom_call.1} parent=1 // pred_check
      _
    $region19: #{tpu_custom_call.1} parent=1 // pred_check_branch
      %1067 = sbr.rel (0) target = $region21
    $region20: #{tpu_custom_call.1} parent=1 // pred_region
      %s1069 = ssub.s32 2048, 2048
      %1070 = vsyncadd [#allocation3], %s1069
      %s1071 = sshll.u32 [#allocation2], 4
      %s1072 = int_to_ptr.vmem [resolvable:$true] %s1071
      %1077 = dma.vmem_to_hbm [thread:$0]  %s1072, 2048, %s4, [#allocation3], 64, 64, 4
    $region21: #{tpu_custom_call.1} parent=1 // pred_fallthru
      _
    // Predicated region
    $region22: #{tpu_custom_call.1} parent=1 // pred_check
      _
    $region23: #{tpu_custom_call.1} parent=1 // pred_check_branch
      %1079 = sbr.rel (0) target = $region25
    $region24: #{tpu_custom_call.1} parent=1 // pred_region
      %1080 = dma.done [#allocation3], 2048
    $region25: #{tpu_custom_call.1} parent=1 // pred_fallthru
      _
    %1081 = vsyncpa [#allocation3], 1

</llo_original>
